<compile_context>
chip_gen: v5e
topology: v5e:2x2
jax: 0.10.0
libtpu: 0.0.40
codegen_flags: <defaults>
</compile_context>

<pallas_src>
import jax
import jax.numpy as jnp
from jax.experimental import pallas as pl
from jax.experimental.pallas import tpu as pltpu


def _embed_kernel(ids_ref, table_ref, out_ref):
    # ids_ref:   (TNr, P)    int32   block of token ids, P tokens per row
    # table_ref: (Vp, D)     float32 full embedding table, vocab padded to 128k
    # out_ref:   (TNr, P*D)  float32 lane-dense packed output (P*D == 128 when D<128)
    ids = ids_ref[...]                                    # (TNr, P)
    tnr, pack = ids.shape
    vp = table_ref.shape[0]
    table = table_ref[...]                                # hoisted: loaded once
    lane_v = jax.lax.broadcasted_iota(jnp.int32, (tnr, vp), 1)
    parts = []
    for q in range(pack):                                 # static unroll, P small
        onehot = (lane_v == ids[:, q:q + 1]).astype(table.dtype)   # (TNr, Vp)
        parts.append(
            jnp.dot(onehot, table, preferred_element_type=jnp.float32)
        )                                                 # (TNr, D) each
    packed = parts[0] if pack == 1 else jnp.concatenate(parts, axis=-1)
    out_ref[...] = packed.astype(out_ref.dtype)


def embedding2d_forward(token_ids, table, *, tile_n=512):
    """token_ids: int32 [..., max_chars_len]; table: float32 [V, D].
    Returns float32 [..., max_chars_len, D] (== nn.Embedding lookup)."""
    orig_shape = token_ids.shape
    v, d = table.shape

    # Pack P tokens per output row so the output block last dim is 128 lanes.
    pack = 128 // d if (d < 128 and 128 % d == 0) else 1

    # Pad the vocab (MXU contraction dim) up to a multiple of 128 with zero
    # rows; the one-hot never selects them, so this is numerically free.
    vp = ((v + 127) // 128) * 128
    table_p = table if vp == v else jnp.concatenate(
        [table, jnp.zeros((vp - v, d), table.dtype)], axis=0)

    flat = token_ids.reshape(-1).astype(jnp.int32)
    n = flat.shape[0]

    # tile_n must be a multiple of 8*pack so the packed block height stays
    # sublane-aligned; pad N up to a multiple of tile_n (tail sliced off).
    align = 8 * pack
    tile_n = max(align, (tile_n // align) * align)
    n_pad = (-n) % tile_n
    if n_pad:
        flat = jnp.concatenate([flat, jnp.zeros((n_pad,), jnp.int32)])
    n_total = n + n_pad

    ids2d = flat.reshape(n_total // pack, pack)
    tnr = tile_n // pack

    out = pl.pallas_call(
        _embed_kernel,
        out_shape=jax.ShapeDtypeStruct((n_total // pack, pack * d), jnp.float32),
        grid=(n_total // tile_n,),
        in_specs=[
            pl.BlockSpec((tnr, pack), lambda i: (i, 0)),   # ids block
            pl.BlockSpec((vp, d), lambda i: (0, 0)),       # full (padded) table
        ],
        out_specs=pl.BlockSpec((tnr, pack * d), lambda i: (i, 0)),
        compiler_params=pltpu.CompilerParams(
            dimension_semantics=("parallel",),             # v7x: 2 TCs share N
        ),
    )(ids2d, table_p)

    # (n_total//P, P*D) row-major is byte-identical to (n_total, D) row-major.
    out = out.reshape(n_total, d)[:n]
    return out.reshape(*orig_shape, d)


if __name__ == "__main__":
    key = jax.random.PRNGKey(0)
    k_tab, k_ids = jax.random.split(key)

    # module shapes: V = vocab size (characters), E.embedding_dim = d
    V_SIZE = 64
    EMB_DIM = 32
    M, MAX_NUM_DOMS, MAX_CHARS_LEN = 2, 4, 8   # [m, max_num_doms, max_chars_len]

    # deterministic "nn.Embedding(V, d)" weight: N(0, 1), same as torch default
    table = jax.random.normal(k_tab, (V_SIZE, EMB_DIM), dtype=jnp.float32)

    token_ids = jax.random.randint(
        k_ids, (M, MAX_NUM_DOMS, MAX_CHARS_LEN), 0, V_SIZE, dtype=jnp.int32
    )

    out = embedding2d_forward(token_ids, table)
    out = jax.block_until_ready(out)

    # correctness check against plain gather (reference semantics of E(X))
    ref = jnp.take(table, token_ids, axis=0)
    assert out.shape == (M, MAX_NUM_DOMS, MAX_CHARS_LEN, EMB_DIM)
    assert jnp.allclose(out, ref, atol=1e-5), "mismatch vs reference gather"

    print("KERNEL_OK")
</pallas_src>

<mosaic_0001>
module attributes {stable_mosaic.version = 11 : i64} {
  func.func @_embed_kernel(%arg0: i32, %arg1: memref<128x4xi32, #tpu.memory_space<vmem>>, %arg2: memref<128x32xf32, #tpu.memory_space<vmem>>, %arg3: memref<128x128xf32, #tpu.memory_space<vmem>>) attributes {dimension_semantics = [#tpu.dimension_semantics<parallel>], iteration_bounds = array<i64: 1>, scalar_prefetch = 0 : i64, scratch_operands = 0 : i64, tpu.core_type = #tpu.core_type<tc>, window_params = [{transform_indices = @transform_0, window_bounds = array<i64: 128, 4>}, {pipeline_mode = #tpu.pipeline_mode<synchronous>, transform_indices = @transform_1, window_bounds = array<i64: 128, 32>}, {transform_indices = @transform_2, window_bounds = array<i64: 128, 128>}]} {
    %c0 = arith.constant 0 : index
    %c0_0 = arith.constant 0 : index
    %0 = vector.load %arg1[%c0, %c0_0] : memref<128x4xi32, #tpu.memory_space<vmem>>, vector<128x4xi32>
    %c0_1 = arith.constant 0 : index
    %c0_2 = arith.constant 0 : index
    %1 = vector.load %arg2[%c0_1, %c0_2] : memref<128x32xf32, #tpu.memory_space<vmem>>, vector<128x32xf32>
    %2 = tpu.iota {dimensions = array<i32: 1>} : vector<128x128xi32>
    %3 = vector.extract_strided_slice %0 {offsets = [0, 0], sizes = [128, 1], strides = [1, 1]} : vector<128x4xi32> to vector<128x1xi32>
    %4 = vector.broadcast %3 : vector<128x1xi32> to vector<128x128xi32>
    %5 = arith.cmpi eq, %2, %4 : vector<128x128xi32>
    %6 = arith.extui %5 : vector<128x128xi1> to vector<128x128xi32>
    %7 = arith.sitofp %6 : vector<128x128xi32> to vector<128x128xf32>
    %cst = arith.constant dense<0.000000e+00> : vector<128x32xf32>
    %8 = tpu.matmul %7, %1, %cst {dimension_numbers = #tpu.dot_dimension_numbers<[1], [0], [0], [1], [0, 0, 1, 1], [], []>} : vector<128x128xf32>, vector<128x32xf32>, vector<128x32xf32> -> vector<128x32xf32>
    %9 = vector.extract_strided_slice %0 {offsets = [0, 1], sizes = [128, 1], strides = [1, 1]} : vector<128x4xi32> to vector<128x1xi32>
    %10 = vector.broadcast %9 : vector<128x1xi32> to vector<128x128xi32>
    %11 = arith.cmpi eq, %2, %10 : vector<128x128xi32>
    %12 = arith.extui %11 : vector<128x128xi1> to vector<128x128xi32>
    %13 = arith.sitofp %12 : vector<128x128xi32> to vector<128x128xf32>
    %cst_3 = arith.constant dense<0.000000e+00> : vector<128x32xf32>
    %14 = tpu.matmul %13, %1, %cst_3 {dimension_numbers = #tpu.dot_dimension_numbers<[1], [0], [0], [1], [0, 0, 1, 1], [], []>} : vector<128x128xf32>, vector<128x32xf32>, vector<128x32xf32> -> vector<128x32xf32>
    %15 = vector.extract_strided_slice %0 {offsets = [0, 2], sizes = [128, 1], strides = [1, 1]} : vector<128x4xi32> to vector<128x1xi32>
    %16 = vector.broadcast %15 : vector<128x1xi32> to vector<128x128xi32>
    %17 = arith.cmpi eq, %2, %16 : vector<128x128xi32>
    %18 = arith.extui %17 : vector<128x128xi1> to vector<128x128xi32>
    %19 = arith.sitofp %18 : vector<128x128xi32> to vector<128x128xf32>
    %cst_4 = arith.constant dense<0.000000e+00> : vector<128x32xf32>
    %20 = tpu.matmul %19, %1, %cst_4 {dimension_numbers = #tpu.dot_dimension_numbers<[1], [0], [0], [1], [0, 0, 1, 1], [], []>} : vector<128x128xf32>, vector<128x32xf32>, vector<128x32xf32> -> vector<128x32xf32>
    %21 = vector.extract_strided_slice %0 {offsets = [0, 3], sizes = [128, 1], strides = [1, 1]} : vector<128x4xi32> to vector<128x1xi32>
    %22 = vector.broadcast %21 : vector<128x1xi32> to vector<128x128xi32>
    %23 = arith.cmpi eq, %2, %22 : vector<128x128xi32>
    %24 = arith.extui %23 : vector<128x128xi1> to vector<128x128xi32>
    %25 = arith.sitofp %24 : vector<128x128xi32> to vector<128x128xf32>
    %cst_5 = arith.constant dense<0.000000e+00> : vector<128x32xf32>
    %26 = tpu.matmul %25, %1, %cst_5 {dimension_numbers = #tpu.dot_dimension_numbers<[1], [0], [0], [1], [0, 0, 1, 1], [], []>} : vector<128x128xf32>, vector<128x32xf32>, vector<128x32xf32> -> vector<128x32xf32>
    %27 = tpu.concatenate %8, %14, %20, %26 in 1 : vector<128x32xf32>, vector<128x32xf32>, vector<128x32xf32>, vector<128x32xf32> -> vector<128x128xf32>
    %c0_6 = arith.constant 0 : index
    %c0_7 = arith.constant 0 : index
    %28 = vector.load %arg3[%c0_6, %c0_7] : memref<128x128xf32, #tpu.memory_space<vmem>>, vector<128x128xf32>
    tpu.vector_store %arg3[%c0_6, %c0_7], %27 {strides = array<i32>} : memref<128x128xf32, #tpu.memory_space<vmem>>, vector<128x128xf32>,
    return
  }
  func.func @transform_0(%arg0: i32) -> (i32, i32) {
    %c0_i32 = arith.constant 0 : i32
    %c0_i32_0 = arith.constant 0 : i32
    return %arg0, %c0_i32 : i32, i32
  }
  func.func @transform_1(%arg0: i32) -> (i32, i32) {
    %c0_i32 = arith.constant 0 : i32
    %c0_i32_0 = arith.constant 0 : i32
    %c0_i32_1 = arith.constant 0 : i32
    return %c0_i32, %c0_i32_0 : i32, i32
  }
  func.func @transform_2(%arg0: i32) -> (i32, i32) {
    %c0_i32 = arith.constant 0 : i32
    %c0_i32_0 = arith.constant 0 : i32
    return %arg0, %c0_i32 : i32, i32
  }
}

</mosaic_0001>

<llo_original>
// kernel: tpu_custom_call.1
$region0: #{tpu_custom_call.1}
  #allocation0 [shape = 'u32[]', space=smem, size = 0x4, offset = 0x4, fixed_abs, tag = 'smem constant byte address 0x4 - core index']
  #allocation1 [shape = 'u32[72,128]{1,0:T(1,128)}', space=vmem, size = 0x9000, scoped, tag = 'internal scratch']
  %s0 = inlined_call_operand.vmem [shape: s32[128,4], index: 0, kind: input, shape index: {}]
  %s1 = inlined_call_operand.vmem [shape: f32[128,32], index: 1, kind: input, shape index: {}]
  %s2 = inlined_call_operand.hbm [shape: f32[128,128], index: 2, kind: output, shape index: {}]
  %s3 = sld [smem:[#allocation0]]
  $region18: #{tpu_custom_call.1} parent=0
    _
  %s5 = ssub.s32 1, %s3
  %s6 = scalar_select 0, %s5, %s3
  $region1: #{tpu_custom_call.1} parent=0
    #allocation2 [shape = 'u8[65536]{0}', space=vmem, size = 0x10000, scoped, tag = 'output window, operand 0, single buffered']
    #allocation3 [shape = 's32[1]{0}', space=sflag, size = 0x4, scoped, tag = 'scoped memory for tpu_custom_call.1']
    %7 = vsyncpa [#allocation3], 0
    // Predicated region
    $region2: #{tpu_custom_call.1} parent=1 // pred_check
      _
    $region3: #{tpu_custom_call.1} parent=1 // pred_check_branch
      %9 = sbr.rel (0) target = $region5
    $region4: #{tpu_custom_call.1} parent=1 // pred_region
      _
    $region5: #{tpu_custom_call.1} parent=1 // pred_fallthru
      _
    // Predicated region
    $region6: #{tpu_custom_call.1} parent=1 // pred_check
      _
    $region7: #{tpu_custom_call.1} parent=1 // pred_check_branch
      %11 = sbr.rel (0) target = $region9
    $region8: #{tpu_custom_call.1} parent=1 // pred_region
      _
    $region9: #{tpu_custom_call.1} parent=1 // pred_fallthru
      _
    %v12 = vld [vmem:[%s0] sm:$0xff]
    %v13 = vld [vmem:[%s0 + $0x8] sm:$0xff]
    %v14 = vld [vmem:[%s0 + $0x10] sm:$0xff]
    %v15 = vld [vmem:[%s0 + $0x18] sm:$0xff]
    %v16 = vld [vmem:[%s0 + $0x20] sm:$0xff]
    %v17 = vld [vmem:[%s0 + $0x28] sm:$0xff]
    %v18 = vld [vmem:[%s0 + $0x30] sm:$0xff]
    %v19 = vld [vmem:[%s0 + $0x38] sm:$0xff]
    %v20 = vld [vmem:[%s0 + $0x40] sm:$0xff]
    %v21 = vld [vmem:[%s0 + $0x48] sm:$0xff]
    %v22 = vld [vmem:[%s0 + $0x50] sm:$0xff]
    %v23 = vld [vmem:[%s0 + $0x58] sm:$0xff]
    %v24 = vld [vmem:[%s0 + $0x60] sm:$0xff]
    %v25 = vld [vmem:[%s0 + $0x68] sm:$0xff]
    %v26 = vld [vmem:[%s0 + $0x70] sm:$0xff]
    %v27 = vld [vmem:[%s0 + $0x78] sm:$0xff]
    %v28 = vld [vmem:[%s1] sm:$0xff]
    %v29 = vld [vmem:[%s1 + $0x8] sm:$0xff]
    %v30 = vld [vmem:[%s1 + $0x10] sm:$0xff]
    %v31 = vld [vmem:[%s1 + $0x18] sm:$0xff]
    %v32 = vld [vmem:[%s1 + $0x20] sm:$0xff]
    %v33 = vld [vmem:[%s1 + $0x28] sm:$0xff]
    %v34 = vld [vmem:[%s1 + $0x30] sm:$0xff]
    %v35 = vld [vmem:[%s1 + $0x38] sm:$0xff]
    %v36 = vld [vmem:[%s1 + $0x40] sm:$0xff]
    %v37 = vld [vmem:[%s1 + $0x48] sm:$0xff]
    %v38 = vld [vmem:[%s1 + $0x50] sm:$0xff]
    %v39 = vld [vmem:[%s1 + $0x58] sm:$0xff]
    %v40 = vld [vmem:[%s1 + $0x60] sm:$0xff]
    %v41 = vld [vmem:[%s1 + $0x68] sm:$0xff]
    %v42 = vld [vmem:[%s1 + $0x70] sm:$0xff]
    %v43 = vld [vmem:[%s1 + $0x78] sm:$0xff]
    %v44 = vlaneseq
    %v45 = vand.u32 %v44, 127
    %46 = vset.pattern.permute.xlu0 0
    %47 = vperm.xlu0 %46, %v12
    %v48 = vpop.permute.xlu0 %47
    %49 = vset.pattern.permute.xlu0 0
    %50 = vperm.xlu0 %49, %v13
    %v51 = vpop.permute.xlu0 %50
    %52 = vset.pattern.permute.xlu0 0
    %53 = vperm.xlu0 %52, %v14
    %v54 = vpop.permute.xlu0 %53
    %55 = vset.pattern.permute.xlu0 0
    %56 = vperm.xlu0 %55, %v15
    %v57 = vpop.permute.xlu0 %56
    %58 = vset.pattern.permute.xlu0 0
    %59 = vperm.xlu0 %58, %v16
    %v60 = vpop.permute.xlu0 %59
    %61 = vset.pattern.permute.xlu0 0
    %62 = vperm.xlu0 %61, %v17
    %v63 = vpop.permute.xlu0 %62
    %64 = vset.pattern.permute.xlu0 0
    %65 = vperm.xlu0 %64, %v18
    %v66 = vpop.permute.xlu0 %65
    %67 = vset.pattern.permute.xlu0 0
    %68 = vperm.xlu0 %67, %v19
    %v69 = vpop.permute.xlu0 %68
    %70 = vset.pattern.permute.xlu0 0
    %71 = vperm.xlu0 %70, %v20
    %v72 = vpop.permute.xlu0 %71
    %73 = vset.pattern.permute.xlu0 0
    %74 = vperm.xlu0 %73, %v21
    %v75 = vpop.permute.xlu0 %74
    %76 = vset.pattern.permute.xlu0 0
    %77 = vperm.xlu0 %76, %v22
    %v78 = vpop.permute.xlu0 %77
    %79 = vset.pattern.permute.xlu0 0
    %80 = vperm.xlu0 %79, %v23
    %v81 = vpop.permute.xlu0 %80
    %82 = vset.pattern.permute.xlu0 0
    %83 = vperm.xlu0 %82, %v24
    %v84 = vpop.permute.xlu0 %83
    %85 = vset.pattern.permute.xlu0 0
    %86 = vperm.xlu0 %85, %v25
    %v87 = vpop.permute.xlu0 %86
    %88 = vset.pattern.permute.xlu0 0
    %89 = vperm.xlu0 %88, %v26
    %v90 = vpop.permute.xlu0 %89
    %91 = vset.pattern.permute.xlu0 0
    %92 = vperm.xlu0 %91, %v27
    %v93 = vpop.permute.xlu0 %92
    %vm94 = vcmp.eq.s32.totalorder %v45, %v48
    %vm95 = vcmp.eq.s32.totalorder %v45, %v51
    %vm96 = vcmp.eq.s32.totalorder %v45, %v54
    %vm97 = vcmp.eq.s32.totalorder %v45, %v57
    %vm98 = vcmp.eq.s32.totalorder %v45, %v60
    %vm99 = vcmp.eq.s32.totalorder %v45, %v63
    %vm100 = vcmp.eq.s32.totalorder %v45, %v66
    %vm101 = vcmp.eq.s32.totalorder %v45, %v69
    %vm102 = vcmp.eq.s32.totalorder %v45, %v72
    %vm103 = vcmp.eq.s32.totalorder %v45, %v75
    %vm104 = vcmp.eq.s32.totalorder %v45, %v78
    %vm105 = vcmp.eq.s32.totalorder %v45, %v81
    %vm106 = vcmp.eq.s32.totalorder %v45, %v84
    %vm107 = vcmp.eq.s32.totalorder %v45, %v87
    %vm108 = vcmp.eq.s32.totalorder %v45, %v90
    %vm109 = vcmp.eq.s32.totalorder %v45, %v93
    %v110 = vsel %vm94, 1, 0
    %v111 = vsel %vm95, 1, 0
    %v112 = vsel %vm96, 1, 0
    %v113 = vsel %vm97, 1, 0
    %v114 = vsel %vm98, 1, 0
    %v115 = vsel %vm99, 1, 0
    %v116 = vsel %vm100, 1, 0
    %v117 = vsel %vm101, 1, 0
    %v118 = vsel %vm102, 1, 0
    %v119 = vsel %vm103, 1, 0
    %v120 = vsel %vm104, 1, 0
    %v121 = vsel %vm105, 1, 0
    %v122 = vsel %vm106, 1, 0
    %v123 = vsel %vm107, 1, 0
    %v124 = vsel %vm108, 1, 0
    %v125 = vsel %vm109, 1, 0
    %v126 = vcvt.s32.f32 %v110
    %v127 = vcvt.s32.f32 %v111
    %v128 = vcvt.s32.f32 %v112
    %v129 = vcvt.s32.f32 %v113
    %v130 = vcvt.s32.f32 %v114
    %v131 = vcvt.s32.f32 %v115
    %v132 = vcvt.s32.f32 %v116
    %v133 = vcvt.s32.f32 %v117
    %v134 = vcvt.s32.f32 %v118
    %v135 = vcvt.s32.f32 %v119
    %v136 = vcvt.s32.f32 %v120
    %v137 = vcvt.s32.f32 %v121
    %v138 = vcvt.s32.f32 %v122
    %v139 = vcvt.s32.f32 %v123
    %v140 = vcvt.s32.f32 %v124
    %v141 = vcvt.s32.f32 %v125
    %142 = vmatpush.msra.mxu0 %v43
    %143 = vmatpush.msra.mxu0 %v42
    %144 = vmatpush.msra.mxu0 %v41
    %145 = vmatpush.msra.mxu0 %v40
    %146 = vmatpush.msra.mxu0 %v39
    %147 = vmatpush.msra.mxu0 %v38
    %148 = vmatpush.msra.mxu0 %v37
    %149 = vmatpush.msra.mxu0 %v36
    %150 = vmatpush.msra.mxu0 %v35
    %151 = vmatpush.msra.mxu0 %v34
    %152 = vmatpush.msra.mxu0 %v33
    %153 = vmatpush.msra.mxu0 %v32
    %154 = vmatpush.msra.mxu0 %v31
    %155 = vmatpush.msra.mxu0 %v30
    %156 = vmatpush.msra.mxu0 %v29
    %157 = vmatpush.msra.mxu0 %v28
    %158 = vmatmul.f32.gmra.mxu0 %v126
    %v159 = vpop.f32.mrf.mxu0
    %v160 = vadd.f32 0.0, %v159
    %161 = vmatmul.f32.gmra.mxu0 %v127
    %v162 = vpop.f32.mrf.mxu0
    %v163 = vadd.f32 0.0, %v162
    %164 = vmatmul.f32.gmra.mxu0 %v128
    %v165 = vpop.f32.mrf.mxu0
    %v166 = vadd.f32 0.0, %v165
    %167 = vmatmul.f32.gmra.mxu0 %v129
    %v168 = vpop.f32.mrf.mxu0
    %v169 = vadd.f32 0.0, %v168
    %170 = vmatmul.f32.gmra.mxu0 %v130
    %v171 = vpop.f32.mrf.mxu0
    %v172 = vadd.f32 0.0, %v171
    %173 = vmatmul.f32.gmra.mxu0 %v131
    %v174 = vpop.f32.mrf.mxu0
    %v175 = vadd.f32 0.0, %v174
    %176 = vmatmul.f32.gmra.mxu0 %v132
    %v177 = vpop.f32.mrf.mxu0
    %v178 = vadd.f32 0.0, %v177
    %179 = vmatmul.f32.gmra.mxu0 %v133
    %v180 = vpop.f32.mrf.mxu0
    %v181 = vadd.f32 0.0, %v180
    %182 = vmatmul.f32.gmra.mxu0 %v134
    %v183 = vpop.f32.mrf.mxu0
    %v184 = vadd.f32 0.0, %v183
    %185 = vmatmul.f32.gmra.mxu0 %v135
    %v186 = vpop.f32.mrf.mxu0
    %v187 = vadd.f32 0.0, %v186
    %188 = vmatmul.f32.gmra.mxu0 %v136
    %v189 = vpop.f32.mrf.mxu0
    %v190 = vadd.f32 0.0, %v189
    %191 = vmatmul.f32.gmra.mxu0 %v137
    %v192 = vpop.f32.mrf.mxu0
    %v193 = vadd.f32 0.0, %v192
    %194 = vmatmul.f32.gmra.mxu0 %v138
    %v195 = vpop.f32.mrf.mxu0
    %v196 = vadd.f32 0.0, %v195
    %197 = vmatmul.f32.gmra.mxu0 %v139
    %v198 = vpop.f32.mrf.mxu0
    %v199 = vadd.f32 0.0, %v198
    %200 = vmatmul.f32.gmra.mxu0 %v140
    %v201 = vpop.f32.mrf.mxu0
    %v202 = vadd.f32 0.0, %v201
    %203 = vmatmul.f32.gmra.mxu0 %v141
    %v204 = vpop.f32.mrf.mxu0
    %v205 = vadd.f32 0.0, %v204
    %206 = vdwg.mxu0
    %207 = vset.pattern.permute.xlu0 1
    %208 = vperm.xlu0 %207, %v12
    %v209 = vpop.permute.xlu0 %208
    %210 = vset.pattern.permute.xlu0 1
    %211 = vperm.xlu0 %210, %v13
    %v212 = vpop.permute.xlu0 %211
    %213 = vset.pattern.permute.xlu0 1
    %214 = vperm.xlu0 %213, %v14
    %v215 = vpop.permute.xlu0 %214
    %216 = vset.pattern.permute.xlu0 1
    %217 = vperm.xlu0 %216, %v15
    %v218 = vpop.permute.xlu0 %217
    %219 = vset.pattern.permute.xlu0 1
    %220 = vperm.xlu0 %219, %v16
    %v221 = vpop.permute.xlu0 %220
    %222 = vset.pattern.permute.xlu0 1
    %223 = vperm.xlu0 %222, %v17
    %v224 = vpop.permute.xlu0 %223
    %225 = vset.pattern.permute.xlu0 1
    %226 = vperm.xlu0 %225, %v18
    %v227 = vpop.permute.xlu0 %226
    %228 = vset.pattern.permute.xlu0 1
    %229 = vperm.xlu0 %228, %v19
    %v230 = vpop.permute.xlu0 %229
    %231 = vset.pattern.permute.xlu0 1
    %232 = vperm.xlu0 %231, %v20
    %v233 = vpop.permute.xlu0 %232
    %234 = vset.pattern.permute.xlu0 1
    %235 = vperm.xlu0 %234, %v21
    %v236 = vpop.permute.xlu0 %235
    %237 = vset.pattern.permute.xlu0 1
    %238 = vperm.xlu0 %237, %v22
    %v239 = vpop.permute.xlu0 %238
    %240 = vset.pattern.permute.xlu0 1
    %241 = vperm.xlu0 %240, %v23
    %v242 = vpop.permute.xlu0 %241
    %243 = vset.pattern.permute.xlu0 1
    %244 = vperm.xlu0 %243, %v24
    %v245 = vpop.permute.xlu0 %244
    %246 = vset.pattern.permute.xlu0 1
    %247 = vperm.xlu0 %246, %v25
    %v248 = vpop.permute.xlu0 %247
    %249 = vset.pattern.permute.xlu0 1
    %250 = vperm.xlu0 %249, %v26
    %v251 = vpop.permute.xlu0 %250
    %252 = vset.pattern.permute.xlu0 1
    %253 = vperm.xlu0 %252, %v27
    %v254 = vpop.permute.xlu0 %253
    %vm255 = vcmp.eq.s32.totalorder %v45, %v209
    %vm256 = vcmp.eq.s32.totalorder %v45, %v212
    %vm257 = vcmp.eq.s32.totalorder %v45, %v215
    %vm258 = vcmp.eq.s32.totalorder %v45, %v218
    %vm259 = vcmp.eq.s32.totalorder %v45, %v221
    %vm260 = vcmp.eq.s32.totalorder %v45, %v224
    %vm261 = vcmp.eq.s32.totalorder %v45, %v227
    %vm262 = vcmp.eq.s32.totalorder %v45, %v230
    %vm263 = vcmp.eq.s32.totalorder %v45, %v233
    %vm264 = vcmp.eq.s32.totalorder %v45, %v236
    %vm265 = vcmp.eq.s32.totalorder %v45, %v239
    %vm266 = vcmp.eq.s32.totalorder %v45, %v242
    %vm267 = vcmp.eq.s32.totalorder %v45, %v245
    %vm268 = vcmp.eq.s32.totalorder %v45, %v248
    %vm269 = vcmp.eq.s32.totalorder %v45, %v251
    %vm270 = vcmp.eq.s32.totalorder %v45, %v254
    %v271 = vsel %vm255, 1, 0
    %v272 = vsel %vm256, 1, 0
    %v273 = vsel %vm257, 1, 0
    %v274 = vsel %vm258, 1, 0
    %v275 = vsel %vm259, 1, 0
    %v276 = vsel %vm260, 1, 0
    %v277 = vsel %vm261, 1, 0
    %v278 = vsel %vm262, 1, 0
    %v279 = vsel %vm263, 1, 0
    %v280 = vsel %vm264, 1, 0
    %v281 = vsel %vm265, 1, 0
    %v282 = vsel %vm266, 1, 0
    %v283 = vsel %vm267, 1, 0
    %v284 = vsel %vm268, 1, 0
    %v285 = vsel %vm269, 1, 0
    %v286 = vsel %vm270, 1, 0
    %v287 = vcvt.s32.f32 %v271
    %v288 = vcvt.s32.f32 %v272
    %v289 = vcvt.s32.f32 %v273
    %v290 = vcvt.s32.f32 %v274
    %v291 = vcvt.s32.f32 %v275
    %v292 = vcvt.s32.f32 %v276
    %v293 = vcvt.s32.f32 %v277
    %v294 = vcvt.s32.f32 %v278
    %v295 = vcvt.s32.f32 %v279
    %v296 = vcvt.s32.f32 %v280
    %v297 = vcvt.s32.f32 %v281
    %v298 = vcvt.s32.f32 %v282
    %v299 = vcvt.s32.f32 %v283
    %v300 = vcvt.s32.f32 %v284
    %v301 = vcvt.s32.f32 %v285
    %v302 = vcvt.s32.f32 %v286
    %303 = vmatpush.msra.mxu0 %v43
    %304 = vmatpush.msra.mxu0 %v42
    %305 = vmatpush.msra.mxu0 %v41
    %306 = vmatpush.msra.mxu0 %v40
    %307 = vmatpush.msra.mxu0 %v39
    %308 = vmatpush.msra.mxu0 %v38
    %309 = vmatpush.msra.mxu0 %v37
    %310 = vmatpush.msra.mxu0 %v36
    %311 = vmatpush.msra.mxu0 %v35
    %312 = vmatpush.msra.mxu0 %v34
    %313 = vmatpush.msra.mxu0 %v33
    %314 = vmatpush.msra.mxu0 %v32
    %315 = vmatpush.msra.mxu0 %v31
    %316 = vmatpush.msra.mxu0 %v30
    %317 = vmatpush.msra.mxu0 %v29
    %318 = vmatpush.msra.mxu0 %v28
    %319 = vmatmul.f32.gmra.mxu0 %v287
    %v320 = vpop.f32.mrf.mxu0
    %v321 = vadd.f32 0.0, %v320
    %322 = vmatmul.f32.gmra.mxu0 %v288
    %v323 = vpop.f32.mrf.mxu0
    %v324 = vadd.f32 0.0, %v323
    %325 = vmatmul.f32.gmra.mxu0 %v289
    %v326 = vpop.f32.mrf.mxu0
    %v327 = vadd.f32 0.0, %v326
    %328 = vmatmul.f32.gmra.mxu0 %v290
    %v329 = vpop.f32.mrf.mxu0
    %v330 = vadd.f32 0.0, %v329
    %331 = vmatmul.f32.gmra.mxu0 %v291
    %v332 = vpop.f32.mrf.mxu0
    %v333 = vadd.f32 0.0, %v332
    %334 = vmatmul.f32.gmra.mxu0 %v292
    %v335 = vpop.f32.mrf.mxu0
    %v336 = vadd.f32 0.0, %v335
    %337 = vmatmul.f32.gmra.mxu0 %v293
    %v338 = vpop.f32.mrf.mxu0
    %v339 = vadd.f32 0.0, %v338
    %340 = vmatmul.f32.gmra.mxu0 %v294
    %v341 = vpop.f32.mrf.mxu0
    %v342 = vadd.f32 0.0, %v341
    %343 = vmatmul.f32.gmra.mxu0 %v295
    %v344 = vpop.f32.mrf.mxu0
    %v345 = vadd.f32 0.0, %v344
    %346 = vmatmul.f32.gmra.mxu0 %v296
    %v347 = vpop.f32.mrf.mxu0
    %v348 = vadd.f32 0.0, %v347
    %349 = vmatmul.f32.gmra.mxu0 %v297
    %v350 = vpop.f32.mrf.mxu0
    %v351 = vadd.f32 0.0, %v350
    %352 = vmatmul.f32.gmra.mxu0 %v298
    %v353 = vpop.f32.mrf.mxu0
    %v354 = vadd.f32 0.0, %v353
    %355 = vmatmul.f32.gmra.mxu0 %v299
    %v356 = vpop.f32.mrf.mxu0
    %v357 = vadd.f32 0.0, %v356
    %358 = vmatmul.f32.gmra.mxu0 %v300
    %v359 = vpop.f32.mrf.mxu0
    %v360 = vadd.f32 0.0, %v359
    %361 = vmatmul.f32.gmra.mxu0 %v301
    %v362 = vpop.f32.mrf.mxu0
    %v363 = vadd.f32 0.0, %v362
    %364 = vmatmul.f32.gmra.mxu0 %v302
    %v365 = vpop.f32.mrf.mxu0
    %v366 = vadd.f32 0.0, %v365
    %367 = vdwg.mxu0
    %368 = vset.pattern.permute.xlu0 2
    %369 = vperm.xlu0 %368, %v12
    %v370 = vpop.permute.xlu0 %369
    %371 = vset.pattern.permute.xlu0 2
    %372 = vperm.xlu0 %371, %v13
    %v373 = vpop.permute.xlu0 %372
    %374 = vset.pattern.permute.xlu0 2
    %375 = vperm.xlu0 %374, %v14
    %v376 = vpop.permute.xlu0 %375
    %377 = vset.pattern.permute.xlu0 2
    %378 = vperm.xlu0 %377, %v15
    %v379 = vpop.permute.xlu0 %378
    %380 = vset.pattern.permute.xlu0 2
    %381 = vperm.xlu0 %380, %v16
    %v382 = vpop.permute.xlu0 %381
    %383 = vset.pattern.permute.xlu0 2
    %384 = vperm.xlu0 %383, %v17
    %v385 = vpop.permute.xlu0 %384
    %386 = vset.pattern.permute.xlu0 2
    %387 = vperm.xlu0 %386, %v18
    %v388 = vpop.permute.xlu0 %387
    %389 = vset.pattern.permute.xlu0 2
    %390 = vperm.xlu0 %389, %v19
    %v391 = vpop.permute.xlu0 %390
    %392 = vset.pattern.permute.xlu0 2
    %393 = vperm.xlu0 %392, %v20
    %v394 = vpop.permute.xlu0 %393
    %395 = vset.pattern.permute.xlu0 2
    %396 = vperm.xlu0 %395, %v21
    %v397 = vpop.permute.xlu0 %396
    %398 = vset.pattern.permute.xlu0 2
    %399 = vperm.xlu0 %398, %v22
    %v400 = vpop.permute.xlu0 %399
    %401 = vset.pattern.permute.xlu0 2
    %402 = vperm.xlu0 %401, %v23
    %v403 = vpop.permute.xlu0 %402
    %404 = vset.pattern.permute.xlu0 2
    %405 = vperm.xlu0 %404, %v24
    %v406 = vpop.permute.xlu0 %405
    %407 = vset.pattern.permute.xlu0 2
    %408 = vperm.xlu0 %407, %v25
    %v409 = vpop.permute.xlu0 %408
    %410 = vset.pattern.permute.xlu0 2
    %411 = vperm.xlu0 %410, %v26
    %v412 = vpop.permute.xlu0 %411
    %413 = vset.pattern.permute.xlu0 2
    %414 = vperm.xlu0 %413, %v27
    %v415 = vpop.permute.xlu0 %414
    %vm416 = vcmp.eq.s32.totalorder %v45, %v370
    %vm417 = vcmp.eq.s32.totalorder %v45, %v373
    %vm418 = vcmp.eq.s32.totalorder %v45, %v376
    %vm419 = vcmp.eq.s32.totalorder %v45, %v379
    %vm420 = vcmp.eq.s32.totalorder %v45, %v382
    %vm421 = vcmp.eq.s32.totalorder %v45, %v385
    %vm422 = vcmp.eq.s32.totalorder %v45, %v388
    %vm423 = vcmp.eq.s32.totalorder %v45, %v391
    %vm424 = vcmp.eq.s32.totalorder %v45, %v394
    %vm425 = vcmp.eq.s32.totalorder %v45, %v397
    %vm426 = vcmp.eq.s32.totalorder %v45, %v400
    %vm427 = vcmp.eq.s32.totalorder %v45, %v403
    %vm428 = vcmp.eq.s32.totalorder %v45, %v406
    %vm429 = vcmp.eq.s32.totalorder %v45, %v409
    %vm430 = vcmp.eq.s32.totalorder %v45, %v412
    %vm431 = vcmp.eq.s32.totalorder %v45, %v415
    %v432 = vsel %vm416, 1, 0
    %v433 = vsel %vm417, 1, 0
    %v434 = vsel %vm418, 1, 0
    %v435 = vsel %vm419, 1, 0
    %v436 = vsel %vm420, 1, 0
    %v437 = vsel %vm421, 1, 0
    %v438 = vsel %vm422, 1, 0
    %v439 = vsel %vm423, 1, 0
    %v440 = vsel %vm424, 1, 0
    %v441 = vsel %vm425, 1, 0
    %v442 = vsel %vm426, 1, 0
    %v443 = vsel %vm427, 1, 0
    %v444 = vsel %vm428, 1, 0
    %v445 = vsel %vm429, 1, 0
    %v446 = vsel %vm430, 1, 0
    %v447 = vsel %vm431, 1, 0
    %v448 = vcvt.s32.f32 %v432
    %v449 = vcvt.s32.f32 %v433
    %v450 = vcvt.s32.f32 %v434
    %v451 = vcvt.s32.f32 %v435
    %v452 = vcvt.s32.f32 %v436
    %v453 = vcvt.s32.f32 %v437
    %v454 = vcvt.s32.f32 %v438
    %v455 = vcvt.s32.f32 %v439
    %v456 = vcvt.s32.f32 %v440
    %v457 = vcvt.s32.f32 %v441
    %v458 = vcvt.s32.f32 %v442
    %v459 = vcvt.s32.f32 %v443
    %v460 = vcvt.s32.f32 %v444
    %v461 = vcvt.s32.f32 %v445
    %v462 = vcvt.s32.f32 %v446
    %v463 = vcvt.s32.f32 %v447
    %464 = vmatpush.msra.mxu0 %v43
    %465 = vmatpush.msra.mxu0 %v42
    %466 = vmatpush.msra.mxu0 %v41
    %467 = vmatpush.msra.mxu0 %v40
    %468 = vmatpush.msra.mxu0 %v39
    %469 = vmatpush.msra.mxu0 %v38
    %470 = vmatpush.msra.mxu0 %v37
    %471 = vmatpush.msra.mxu0 %v36
    %472 = vmatpush.msra.mxu0 %v35
    %473 = vmatpush.msra.mxu0 %v34
    %474 = vmatpush.msra.mxu0 %v33
    %475 = vmatpush.msra.mxu0 %v32
    %476 = vmatpush.msra.mxu0 %v31
    %477 = vmatpush.msra.mxu0 %v30
    %478 = vmatpush.msra.mxu0 %v29
    %479 = vmatpush.msra.mxu0 %v28
    %480 = vmatmul.f32.gmra.mxu0 %v448
    %v481 = vpop.f32.mrf.mxu0
    %v482 = vadd.f32 0.0, %v481
    %483 = vmatmul.f32.gmra.mxu0 %v449
    %v484 = vpop.f32.mrf.mxu0
    %v485 = vadd.f32 0.0, %v484
    %486 = vmatmul.f32.gmra.mxu0 %v450
    %v487 = vpop.f32.mrf.mxu0
    %v488 = vadd.f32 0.0, %v487
    %489 = vmatmul.f32.gmra.mxu0 %v451
    %v490 = vpop.f32.mrf.mxu0
    %v491 = vadd.f32 0.0, %v490
    %492 = vmatmul.f32.gmra.mxu0 %v452
    %v493 = vpop.f32.mrf.mxu0
    %v494 = vadd.f32 0.0, %v493
    %495 = vmatmul.f32.gmra.mxu0 %v453
    %v496 = vpop.f32.mrf.mxu0
    %v497 = vadd.f32 0.0, %v496
    %498 = vmatmul.f32.gmra.mxu0 %v454
    %v499 = vpop.f32.mrf.mxu0
    %v500 = vadd.f32 0.0, %v499
    %501 = vmatmul.f32.gmra.mxu0 %v455
    %v502 = vpop.f32.mrf.mxu0
    %v503 = vadd.f32 0.0, %v502
    %504 = vmatmul.f32.gmra.mxu0 %v456
    %v505 = vpop.f32.mrf.mxu0
    %v506 = vadd.f32 0.0, %v505
    %507 = vmatmul.f32.gmra.mxu0 %v457
    %v508 = vpop.f32.mrf.mxu0
    %v509 = vadd.f32 0.0, %v508
    %510 = vmatmul.f32.gmra.mxu0 %v458
    %v511 = vpop.f32.mrf.mxu0
    %v512 = vadd.f32 0.0, %v511
    %513 = vmatmul.f32.gmra.mxu0 %v459
    %v514 = vpop.f32.mrf.mxu0
    %v515 = vadd.f32 0.0, %v514
    %516 = vmatmul.f32.gmra.mxu0 %v460
    %v517 = vpop.f32.mrf.mxu0
    %v518 = vadd.f32 0.0, %v517
    %519 = vmatmul.f32.gmra.mxu0 %v461
    %v520 = vpop.f32.mrf.mxu0
    %v521 = vadd.f32 0.0, %v520
    %522 = vmatmul.f32.gmra.mxu0 %v462
    %v523 = vpop.f32.mrf.mxu0
    %v524 = vadd.f32 0.0, %v523
    %525 = vmatmul.f32.gmra.mxu0 %v463
    %v526 = vpop.f32.mrf.mxu0
    %v527 = vadd.f32 0.0, %v526
    %528 = vdwg.mxu0
    %529 = vset.pattern.permute.xlu0 3
    %530 = vperm.xlu0 %529, %v12
    %v531 = vpop.permute.xlu0 %530
    %532 = vset.pattern.permute.xlu0 3
    %533 = vperm.xlu0 %532, %v13
    %v534 = vpop.permute.xlu0 %533
    %535 = vset.pattern.permute.xlu0 3
    %536 = vperm.xlu0 %535, %v14
    %v537 = vpop.permute.xlu0 %536
    %538 = vset.pattern.permute.xlu0 3
    %539 = vperm.xlu0 %538, %v15
    %v540 = vpop.permute.xlu0 %539
    %541 = vset.pattern.permute.xlu0 3
    %542 = vperm.xlu0 %541, %v16
    %v543 = vpop.permute.xlu0 %542
    %544 = vset.pattern.permute.xlu0 3
    %545 = vperm.xlu0 %544, %v17
    %v546 = vpop.permute.xlu0 %545
    %547 = vset.pattern.permute.xlu0 3
    %548 = vperm.xlu0 %547, %v18
    %v549 = vpop.permute.xlu0 %548
    %550 = vset.pattern.permute.xlu0 3
    %551 = vperm.xlu0 %550, %v19
    %v552 = vpop.permute.xlu0 %551
    %553 = vset.pattern.permute.xlu0 3
    %554 = vperm.xlu0 %553, %v20
    %v555 = vpop.permute.xlu0 %554
    %556 = vset.pattern.permute.xlu0 3
    %557 = vperm.xlu0 %556, %v21
    %v558 = vpop.permute.xlu0 %557
    %559 = vset.pattern.permute.xlu0 3
    %560 = vperm.xlu0 %559, %v22
    %v561 = vpop.permute.xlu0 %560
    %562 = vset.pattern.permute.xlu0 3
    %563 = vperm.xlu0 %562, %v23
    %v564 = vpop.permute.xlu0 %563
    %565 = vset.pattern.permute.xlu0 3
    %566 = vperm.xlu0 %565, %v24
    %v567 = vpop.permute.xlu0 %566
    %568 = vset.pattern.permute.xlu0 3
    %569 = vperm.xlu0 %568, %v25
    %v570 = vpop.permute.xlu0 %569
    %571 = vset.pattern.permute.xlu0 3
    %572 = vperm.xlu0 %571, %v26
    %v573 = vpop.permute.xlu0 %572
    %574 = vset.pattern.permute.xlu0 3
    %575 = vperm.xlu0 %574, %v27
    %v576 = vpop.permute.xlu0 %575
    %vm577 = vcmp.eq.s32.totalorder %v45, %v531
    %vm578 = vcmp.eq.s32.totalorder %v45, %v534
    %vm579 = vcmp.eq.s32.totalorder %v45, %v537
    %vm580 = vcmp.eq.s32.totalorder %v45, %v540
    %vm581 = vcmp.eq.s32.totalorder %v45, %v543
    %vm582 = vcmp.eq.s32.totalorder %v45, %v546
    %vm583 = vcmp.eq.s32.totalorder %v45, %v549
    %vm584 = vcmp.eq.s32.totalorder %v45, %v552
    %vm585 = vcmp.eq.s32.totalorder %v45, %v555
    %vm586 = vcmp.eq.s32.totalorder %v45, %v558
    %vm587 = vcmp.eq.s32.totalorder %v45, %v561
    %vm588 = vcmp.eq.s32.totalorder %v45, %v564
    %vm589 = vcmp.eq.s32.totalorder %v45, %v567
    %vm590 = vcmp.eq.s32.totalorder %v45, %v570
    %vm591 = vcmp.eq.s32.totalorder %v45, %v573
    %vm592 = vcmp.eq.s32.totalorder %v45, %v576
    %v593 = vsel %vm577, 1, 0
    %v594 = vsel %vm578, 1, 0
    %v595 = vsel %vm579, 1, 0
    %v596 = vsel %vm580, 1, 0
    %v597 = vsel %vm581, 1, 0
    %v598 = vsel %vm582, 1, 0
    %v599 = vsel %vm583, 1, 0
    %v600 = vsel %vm584, 1, 0
    %v601 = vsel %vm585, 1, 0
    %v602 = vsel %vm586, 1, 0
    %v603 = vsel %vm587, 1, 0
    %v604 = vsel %vm588, 1, 0
    %v605 = vsel %vm589, 1, 0
    %v606 = vsel %vm590, 1, 0
    %v607 = vsel %vm591, 1, 0
    %v608 = vsel %vm592, 1, 0
    %v609 = vcvt.s32.f32 %v593
    %v610 = vcvt.s32.f32 %v594
    %v611 = vcvt.s32.f32 %v595
    %v612 = vcvt.s32.f32 %v596
    %v613 = vcvt.s32.f32 %v597
    %v614 = vcvt.s32.f32 %v598
    %v615 = vcvt.s32.f32 %v599
    %v616 = vcvt.s32.f32 %v600
    %v617 = vcvt.s32.f32 %v601
    %v618 = vcvt.s32.f32 %v602
    %v619 = vcvt.s32.f32 %v603
    %v620 = vcvt.s32.f32 %v604
    %v621 = vcvt.s32.f32 %v605
    %v622 = vcvt.s32.f32 %v606
    %v623 = vcvt.s32.f32 %v607
    %v624 = vcvt.s32.f32 %v608
    %625 = vmatpush.msra.mxu0 %v43
    %626 = vmatpush.msra.mxu0 %v42
    %627 = vmatpush.msra.mxu0 %v41
    %628 = vmatpush.msra.mxu0 %v40
    %629 = vmatpush.msra.mxu0 %v39
    %630 = vmatpush.msra.mxu0 %v38
    %631 = vmatpush.msra.mxu0 %v37
    %632 = vmatpush.msra.mxu0 %v36
    %633 = vmatpush.msra.mxu0 %v35
    %634 = vmatpush.msra.mxu0 %v34
    %635 = vmatpush.msra.mxu0 %v33
    %636 = vmatpush.msra.mxu0 %v32
    %637 = vmatpush.msra.mxu0 %v31
    %638 = vmatpush.msra.mxu0 %v30
    %639 = vmatpush.msra.mxu0 %v29
    %640 = vmatpush.msra.mxu0 %v28
    %641 = vmatmul.f32.gmra.mxu0 %v609
    %v642 = vpop.f32.mrf.mxu0
    %v643 = vadd.f32 0.0, %v642
    %644 = vmatmul.f32.gmra.mxu0 %v610
    %v645 = vpop.f32.mrf.mxu0
    %v646 = vadd.f32 0.0, %v645
    %647 = vmatmul.f32.gmra.mxu0 %v611
    %v648 = vpop.f32.mrf.mxu0
    %v649 = vadd.f32 0.0, %v648
    %650 = vmatmul.f32.gmra.mxu0 %v612
    %v651 = vpop.f32.mrf.mxu0
    %v652 = vadd.f32 0.0, %v651
    %653 = vmatmul.f32.gmra.mxu0 %v613
    %v654 = vpop.f32.mrf.mxu0
    %v655 = vadd.f32 0.0, %v654
    %656 = vmatmul.f32.gmra.mxu0 %v614
    %v657 = vpop.f32.mrf.mxu0
    %v658 = vadd.f32 0.0, %v657
    %659 = vmatmul.f32.gmra.mxu0 %v615
    %v660 = vpop.f32.mrf.mxu0
    %v661 = vadd.f32 0.0, %v660
    %662 = vmatmul.f32.gmra.mxu0 %v616
    %v663 = vpop.f32.mrf.mxu0
    %v664 = vadd.f32 0.0, %v663
    %665 = vmatmul.f32.gmra.mxu0 %v617
    %v666 = vpop.f32.mrf.mxu0
    %v667 = vadd.f32 0.0, %v666
    %668 = vmatmul.f32.gmra.mxu0 %v618
    %v669 = vpop.f32.mrf.mxu0
    %v670 = vadd.f32 0.0, %v669
    %671 = vmatmul.f32.gmra.mxu0 %v619
    %v672 = vpop.f32.mrf.mxu0
    %v673 = vadd.f32 0.0, %v672
    %674 = vmatmul.f32.gmra.mxu0 %v620
    %v675 = vpop.f32.mrf.mxu0
    %v676 = vadd.f32 0.0, %v675
    %677 = vmatmul.f32.gmra.mxu0 %v621
    %v678 = vpop.f32.mrf.mxu0
    %v679 = vadd.f32 0.0, %v678
    %680 = vmatmul.f32.gmra.mxu0 %v622
    %v681 = vpop.f32.mrf.mxu0
    %v682 = vadd.f32 0.0, %v681
    %683 = vmatmul.f32.gmra.mxu0 %v623
    %v684 = vpop.f32.mrf.mxu0
    %v685 = vadd.f32 0.0, %v684
    %686 = vmatmul.f32.gmra.mxu0 %v624
    %v687 = vpop.f32.mrf.mxu0
    %v688 = vadd.f32 0.0, %v687
    %689 = vdwg.mxu0
    %706 = vrot.lane.b32.xlu0 %v321, 32
    %v707 = vpop.permute.xlu0 %706
    %708 = vrot.lane.b32.xlu0 %v324, 32
    %v709 = vpop.permute.xlu0 %708
    %710 = vrot.lane.b32.xlu0 %v327, 32
    %v711 = vpop.permute.xlu0 %710
    %712 = vrot.lane.b32.xlu0 %v330, 32
    %v713 = vpop.permute.xlu0 %712
    %714 = vrot.lane.b32.xlu0 %v333, 32
    %v715 = vpop.permute.xlu0 %714
    %716 = vrot.lane.b32.xlu0 %v336, 32
    %v717 = vpop.permute.xlu0 %716
    %718 = vrot.lane.b32.xlu0 %v339, 32
    %v719 = vpop.permute.xlu0 %718
    %720 = vrot.lane.b32.xlu0 %v342, 32
    %v721 = vpop.permute.xlu0 %720
    %722 = vrot.lane.b32.xlu0 %v345, 32
    %v723 = vpop.permute.xlu0 %722
    %724 = vrot.lane.b32.xlu0 %v348, 32
    %v725 = vpop.permute.xlu0 %724
    %726 = vrot.lane.b32.xlu0 %v351, 32
    %v727 = vpop.permute.xlu0 %726
    %728 = vrot.lane.b32.xlu0 %v354, 32
    %v729 = vpop.permute.xlu0 %728
    %730 = vrot.lane.b32.xlu0 %v357, 32
    %v731 = vpop.permute.xlu0 %730
    %732 = vrot.lane.b32.xlu0 %v360, 32
    %v733 = vpop.permute.xlu0 %732
    %734 = vrot.lane.b32.xlu0 %v363, 32
    %v735 = vpop.permute.xlu0 %734
    %736 = vrot.lane.b32.xlu0 %v366, 32
    %v737 = vpop.permute.xlu0 %736
    %770 = vrot.lane.b32.xlu0 %v482, 64
    %v771 = vpop.permute.xlu0 %770
    %772 = vrot.lane.b32.xlu0 %v485, 64
    %v773 = vpop.permute.xlu0 %772
    %774 = vrot.lane.b32.xlu0 %v488, 64
    %v775 = vpop.permute.xlu0 %774
    %776 = vrot.lane.b32.xlu0 %v491, 64
    %v777 = vpop.permute.xlu0 %776
    %778 = vrot.lane.b32.xlu0 %v494, 64
    %v779 = vpop.permute.xlu0 %778
    %780 = vrot.lane.b32.xlu0 %v497, 64
    %v781 = vpop.permute.xlu0 %780
    %782 = vrot.lane.b32.xlu0 %v500, 64
    %v783 = vpop.permute.xlu0 %782
    %784 = vrot.lane.b32.xlu0 %v503, 64
    %v785 = vpop.permute.xlu0 %784
    %786 = vrot.lane.b32.xlu0 %v506, 64
    %v787 = vpop.permute.xlu0 %786
    %788 = vrot.lane.b32.xlu0 %v509, 64
    %v789 = vpop.permute.xlu0 %788
    %790 = vrot.lane.b32.xlu0 %v512, 64
    %v791 = vpop.permute.xlu0 %790
    %792 = vrot.lane.b32.xlu0 %v515, 64
    %v793 = vpop.permute.xlu0 %792
    %794 = vrot.lane.b32.xlu0 %v518, 64
    %v795 = vpop.permute.xlu0 %794
    %796 = vrot.lane.b32.xlu0 %v521, 64
    %v797 = vpop.permute.xlu0 %796
    %798 = vrot.lane.b32.xlu0 %v524, 64
    %v799 = vpop.permute.xlu0 %798
    %800 = vrot.lane.b32.xlu0 %v527, 64
    %v801 = vpop.permute.xlu0 %800
    %834 = vrot.lane.b32.xlu0 %v643, 96
    %v835 = vpop.permute.xlu0 %834
    %836 = vrot.lane.b32.xlu0 %v646, 96
    %v837 = vpop.permute.xlu0 %836
    %838 = vrot.lane.b32.xlu0 %v649, 96
    %v839 = vpop.permute.xlu0 %838
    %840 = vrot.lane.b32.xlu0 %v652, 96
    %v841 = vpop.permute.xlu0 %840
    %842 = vrot.lane.b32.xlu0 %v655, 96
    %v843 = vpop.permute.xlu0 %842
    %844 = vrot.lane.b32.xlu0 %v658, 96
    %v845 = vpop.permute.xlu0 %844
    %846 = vrot.lane.b32.xlu0 %v661, 96
    %v847 = vpop.permute.xlu0 %846
    %848 = vrot.lane.b32.xlu0 %v664, 96
    %v849 = vpop.permute.xlu0 %848
    %850 = vrot.lane.b32.xlu0 %v667, 96
    %v851 = vpop.permute.xlu0 %850
    %852 = vrot.lane.b32.xlu0 %v670, 96
    %v853 = vpop.permute.xlu0 %852
    %854 = vrot.lane.b32.xlu0 %v673, 96
    %v855 = vpop.permute.xlu0 %854
    %856 = vrot.lane.b32.xlu0 %v676, 96
    %v857 = vpop.permute.xlu0 %856
    %858 = vrot.lane.b32.xlu0 %v679, 96
    %v859 = vpop.permute.xlu0 %858
    %860 = vrot.lane.b32.xlu0 %v682, 96
    %v861 = vpop.permute.xlu0 %860
    %862 = vrot.lane.b32.xlu0 %v685, 96
    %v863 = vpop.permute.xlu0 %862
    %864 = vrot.lane.b32.xlu0 %v688, 96
    %v865 = vpop.permute.xlu0 %864
    %vm882 = vcmask 261120
    %v883 = vsel %vm882, %v160, %v707
    %v884 = vsel %vm882, %v163, %v709
    %v885 = vsel %vm882, %v166, %v711
    %v886 = vsel %vm882, %v169, %v713
    %v887 = vsel %vm882, %v172, %v715
    %v888 = vsel %vm882, %v175, %v717
    %v889 = vsel %vm882, %v178, %v719
    %v890 = vsel %vm882, %v181, %v721
    %v891 = vsel %vm882, %v184, %v723
    %v892 = vsel %vm882, %v187, %v725
    %v893 = vsel %vm882, %v190, %v727
    %v894 = vsel %vm882, %v193, %v729
    %v895 = vsel %vm882, %v196, %v731
    %v896 = vsel %vm882, %v199, %v733
    %v897 = vsel %vm882, %v202, %v735
    %v898 = vsel %vm882, %v205, %v737
    %vm899 = vcmask 523264
    %v900 = vsel %vm899, %v883, %v771
    %v901 = vsel %vm899, %v884, %v773
    %v902 = vsel %vm899, %v885, %v775
    %v903 = vsel %vm899, %v886, %v777
    %v904 = vsel %vm899, %v887, %v779
    %v905 = vsel %vm899, %v888, %v781
    %v906 = vsel %vm899, %v889, %v783
    %v907 = vsel %vm899, %v890, %v785
    %v908 = vsel %vm899, %v891, %v787
    %v909 = vsel %vm899, %v892, %v789
    %v910 = vsel %vm899, %v893, %v791
    %v911 = vsel %vm899, %v894, %v793
    %v912 = vsel %vm899, %v895, %v795
    %v913 = vsel %vm899, %v896, %v797
    %v914 = vsel %vm899, %v897, %v799
    %v915 = vsel %vm899, %v898, %v801
    %vm916 = vcmask 785408
    %v917 = vsel %vm916, %v900, %v835
    %v918 = vsel %vm916, %v901, %v837
    %v919 = vsel %vm916, %v902, %v839
    %v920 = vsel %vm916, %v903, %v841
    %v921 = vsel %vm916, %v904, %v843
    %v922 = vsel %vm916, %v905, %v845
    %v923 = vsel %vm916, %v906, %v847
    %v924 = vsel %vm916, %v907, %v849
    %v925 = vsel %vm916, %v908, %v851
    %v926 = vsel %vm916, %v909, %v853
    %v927 = vsel %vm916, %v910, %v855
    %v928 = vsel %vm916, %v911, %v857
    %v929 = vsel %vm916, %v912, %v859
    %v930 = vsel %vm916, %v913, %v861
    %v931 = vsel %vm916, %v914, %v863
    %v932 = vsel %vm916, %v915, %v865
    %933 = vst [vmem:[#allocation2] sm:$0xff] %v917
    %934 = vst [vmem:[#allocation2 + $0x8] sm:$0xff] %v918
    %935 = vst [vmem:[#allocation2 + $0x10] sm:$0xff] %v919
    %936 = vst [vmem:[#allocation2 + $0x18] sm:$0xff] %v920
    %937 = vst [vmem:[#allocation2 + $0x20] sm:$0xff] %v921
    %938 = vst [vmem:[#allocation2 + $0x28] sm:$0xff] %v922
    %939 = vst [vmem:[#allocation2 + $0x30] sm:$0xff] %v923
    %940 = vst [vmem:[#allocation2 + $0x38] sm:$0xff] %v924
    %941 = vst [vmem:[#allocation2 + $0x40] sm:$0xff] %v925
    %942 = vst [vmem:[#allocation2 + $0x48] sm:$0xff] %v926
    %943 = vst [vmem:[#allocation2 + $0x50] sm:$0xff] %v927
    %944 = vst [vmem:[#allocation2 + $0x58] sm:$0xff] %v928
    %945 = vst [vmem:[#allocation2 + $0x60] sm:$0xff] %v929
    %946 = vst [vmem:[#allocation2 + $0x68] sm:$0xff] %v930
    %947 = vst [vmem:[#allocation2 + $0x70] sm:$0xff] %v931
    %948 = vst [vmem:[#allocation2 + $0x78] sm:$0xff] %v932
    // Predicated region
    $region10: #{tpu_custom_call.1} parent=1 // pred_check
      _
    $region11: #{tpu_custom_call.1} parent=1 // pred_check_branch
      %950 = sbr.rel (0) target = $region13
    $region12: #{tpu_custom_call.1} parent=1 // pred_region
      %952 = vsyncadd [#allocation3], 0
      %s953 = sshll.u32 [#allocation2], 4
      %s954 = int_to_ptr.vmem [resolvable:$true] %s953
      %s955 = sshll.u32 %s2, 4
      %s956 = int_to_ptr.hbm [resolvable:$true] %s955
      %961 = dma.vmem_to_hbm [thread:$0]  %s954, 2048, %s956, [#allocation3], 128, 128, 8
    $region13: #{tpu_custom_call.1} parent=1 // pred_fallthru
      _
    // Predicated region
    $region14: #{tpu_custom_call.1} parent=1 // pred_check
      _
    $region15: #{tpu_custom_call.1} parent=1 // pred_check_branch
      %963 = sbr.rel (0) target = $region17
    $region16: #{tpu_custom_call.1} parent=1 // pred_region
      %965 = dma.done [#allocation3], 2048
    $region17: #{tpu_custom_call.1} parent=1 // pred_fallthru
      _
    %966 = vsyncpa [#allocation3], 1

</llo_original>
